<compile_context>
chip_gen: v7x
topology: tpu7x:2x2x1
jax: 0.10.0
libtpu: 0.0.40
codegen_flags: <defaults>
</compile_context>

<pallas_src>
import functools

import jax
import jax.numpy as jnp
from jax.experimental import pallas as pl
from jax.experimental.pallas import tpu as pltpu


def _imip_kernel(x_ref, w_ref, b_ref, out_ref, kp_ref, max_acc, idx_acc,
                 *, hw: int, tile_hw: int):
    """Grid = (batch, hw_tile).  Channel-major tiles.

    x_ref  : (1, C_in, TILE_HW)   image tile (pixels on lanes)
    w_ref  : (C_out, C_in)        1x1 conv weight
    b_ref  : (C_out, 1)           bias
    out_ref: (1, C_out, TILE_HW)  score-map tile (streams out per step)
    kp_ref : (1, C_out, 1)        flat argmax index (written on last HW step)
    max_acc: (C_out, 1) f32       running per-channel max
    idx_acc: (C_out, 1) i32       running per-channel flat argmax index
    """
    j = pl.program_id(1)
    n_hw = pl.num_programs(1)

    @pl.when(j == 0)
    def _init():
        max_acc[...] = jnp.full_like(max_acc, -jnp.inf)
        idx_acc[...] = jnp.zeros_like(idx_acc)

    x = x_ref[0]                                      # (C_in, TILE_HW)
    w = w_ref[...]                                    # (C_out, C_in)
    b = b_ref[...]                                    # (C_out, 1)

    # 1x1 conv == channel matmul on the MXU; HW stays on lanes.
    y = jnp.dot(w, x, preferred_element_type=jnp.float32) + b   # (C_out, TILE_HW)
    out_ref[0] = y.astype(out_ref.dtype)

    c_out = y.shape[0]
    offset = j * tile_hw
    # Per-tile lane iota + scalar offset -> flat spatial index h*W + w.
    flat = jax.lax.broadcasted_iota(jnp.int32, (c_out, tile_hw), 1) + offset
    # Mask out-of-range lanes of a (possibly padded) last tile.
    y_valid = jnp.where(flat < hw, y, -jnp.inf)

    tile_max = jnp.max(y_valid, axis=1, keepdims=True)            # (C_out, 1)
    # First occurrence within the tile = smallest flat index hitting the max.
    tile_idx = jnp.min(
        jnp.where(y_valid == tile_max, flat, jnp.int32(hw)),
        axis=1, keepdims=True)                                    # (C_out, 1)

    # Strictly-greater update: earlier tiles win ties -> global first occurrence.
    better = tile_max > max_acc[...]
    idx_acc[...] = jnp.where(better, tile_idx, idx_acc[...])
    max_acc[...] = jnp.where(better, tile_max, max_acc[...])

    @pl.when(j == n_hw - 1)
    def _finalize():
        kp_ref[0] = idx_acc[...]


def _pick_tile_hw(hw: int, c_in: int, c_out: int,
                  budget_bytes: int = 24 << 20) -> int:
    """Largest multiple-of-128 HW tile whose double-buffered f32 input+output
    traffic stays under `budget_bytes` (safe on v7x's 64 MiB VMEM, leaves
    headroom under v5e/v6e scoped limits)."""
    hw_pad = pl.cdiv(hw, 128) * 128
    per_pixel = 2 * 4 * (c_in + c_out)          # double-buffered, float32
    cap = max(128, (budget_bytes // per_pixel) // 128 * 128)
    return min(hw_pad, cap)


def imipnet_extract_keypoints_batched(images_nchw, weight, bias, *,
                                      tile_hw=None):
    """Mirrors ImipNet.extract_keypoints_batched.

    images_nchw: (N, C_in, H, W) float32
    weight     : (C_out, C_in)   float32  (1x1 conv weight, squeezed)
    bias       : (C_out,)        float32

    Returns (keypoints_xy, output):
      keypoints_xy: (N, 2, C_out) float32   [x; y] per (batch, channel)
      output      : (N, C_out, H, W) float32 score maps
    """
    n, c_in, h, w = images_nchw.shape
    c_out = weight.shape[0]
    hw = h * w

    if tile_hw is None:
        tile_hw = _pick_tile_hw(hw, c_in, c_out)
    num_hw_tiles = pl.cdiv(hw, tile_hw)

    # Free reshape: NCHW -> (N, C_in, HW).  No transposes anywhere.
    x_cm = images_nchw.reshape(n, c_in, hw)
    b_c1 = bias.reshape(c_out, 1)

    kernel = functools.partial(_imip_kernel, hw=hw, tile_hw=tile_hw)

    out_flat, kp_idx = pl.pallas_call(
        kernel,
        out_shape=(
            jax.ShapeDtypeStruct((n, c_out, hw), jnp.float32),
            jax.ShapeDtypeStruct((n, c_out, 1), jnp.int32),
        ),
        grid_spec=pltpu.PrefetchScalarGridSpec(
            num_scalar_prefetch=0,
            grid=(n, num_hw_tiles),
            in_specs=[
                pl.BlockSpec((1, c_in, tile_hw), lambda i, j: (i, 0, j)),
                pl.BlockSpec((c_out, c_in), lambda i, j: (0, 0)),
                pl.BlockSpec((c_out, 1), lambda i, j: (0, 0)),
            ],
            out_specs=[
                pl.BlockSpec((1, c_out, tile_hw), lambda i, j: (i, 0, j)),
                pl.BlockSpec((1, c_out, 1), lambda i, j: (i, 0, 0)),
            ],
            scratch_shapes=[
                pltpu.VMEM((c_out, 1), jnp.float32),   # running max
                pltpu.VMEM((c_out, 1), jnp.int32),     # running argmax index
            ],
        ),
        compiler_params=pltpu.CompilerParams(
            dimension_semantics=("parallel", "arbitrary"),
            vmem_limit_bytes=64 * 1024 * 1024,
        ),
    )(x_cm, weight, b_c1)

    # Free reshape back to NCHW score maps.
    output_nchw = out_flat.reshape(n, c_out, h, w)

    # Tiny index decode (O(N*C_out)) in the wrapper, matching torch:
    # keypoints[0] = idx % W ; keypoints[1] = idx // W.
    idx = kp_idx[:, :, 0]
    kx = (idx % w).astype(jnp.float32)
    ky = (idx // w).astype(jnp.float32)
    keypoints_xy = jnp.stack([kx, ky], axis=1)        # (N, 2, C_out)
    return keypoints_xy, output_nchw


def _reference(images_nchw, weight, bias):
    """Pure-JAX reference implementing the same semantics."""
    n, _, h, w = images_nchw.shape
    out = jnp.einsum("oi,nihw->nohw", weight, images_nchw) + bias[None, :, None, None]
    flat = out.reshape(n, out.shape[1], -1)
    arg = jnp.argmax(flat, axis=2)                    # first occurrence, like torch
    kx = (arg % w).astype(jnp.float32)
    ky = (arg // w).astype(jnp.float32)
    kp = jnp.stack([kx, ky], axis=1)                  # (N, 2, C_out)
    return kp, out


if __name__ == "__main__":
    N, C_IN, C_OUT, H, W = 2, 4, 8, 16, 16

    key = jax.random.PRNGKey(0)
    k_img, k_w, k_b = jax.random.split(key, 3)
    images = jax.random.normal(k_img, (N, C_IN, H, W), dtype=jnp.float32)
    weight = jax.random.normal(k_w, (C_OUT, C_IN), dtype=jnp.float32) * 0.1
    bias = jax.random.normal(k_b, (C_OUT,), dtype=jnp.float32) * 0.01

    # tile_hw=128 forces 2 HW tiles so the running-argmax accumulator path is
    # exercised even at this small demo size.
    kp, out = imipnet_extract_keypoints_batched(images, weight, bias, tile_hw=128)
    kp, out = jax.block_until_ready((kp, out))

    kp_ref, out_ref = _reference(images, weight, bias)
    assert out.shape == (N, C_OUT, H, W) and kp.shape == (N, 2, C_OUT)
    assert jnp.allclose(out, out_ref, atol=1e-4, rtol=1e-4)
    assert jnp.array_equal(kp, kp_ref)

    print("KERNEL_OK")
</pallas_src>

<mosaic_0001>
module attributes {stable_mosaic.version = 11 : i64} {
  func.func @_imip_kernel(%arg0: i32, %arg1: i32, %arg2: memref<1x4x128xf32, #tpu.memory_space<vmem>>, %arg3: memref<8x4xf32, #tpu.memory_space<vmem>>, %arg4: memref<8x1xf32, #tpu.memory_space<vmem>>, %arg5: memref<1x8x128xf32, #tpu.memory_space<vmem>>, %arg6: memref<1x8x1xi32, #tpu.memory_space<vmem>>, %arg7: memref<8x1xf32, #tpu.memory_space<vmem>>, %arg8: memref<8x1xi32, #tpu.memory_space<vmem>>) attributes {dimension_semantics = [#tpu.dimension_semantics<parallel>, #tpu.dimension_semantics<arbitrary>], iteration_bounds = array<i64: 2, 2>, scalar_prefetch = 0 : i64, scratch_operands = 2 : i64, tpu.core_type = #tpu.core_type<tc>, window_params = [{transform_indices = @transform_0, window_bounds = array<i64: 1, 4, 128>}, {pipeline_mode = #tpu.pipeline_mode<synchronous>, transform_indices = @transform_1, window_bounds = array<i64: 8, 4>}, {pipeline_mode = #tpu.pipeline_mode<synchronous>, transform_indices = @transform_2, window_bounds = array<i64: 8, 1>}, {transform_indices = @transform_3, window_bounds = array<i64: 1, 8, 128>}, {transform_indices = @transform_4, window_bounds = array<i64: 1, 8, 1>}]} {
    %c0_i32 = arith.constant 0 : i32
    %0 = arith.cmpi eq, %arg1, %c0_i32 : i32
    %1 = arith.extui %0 : i1 to i32
    %c0_i32_0 = arith.constant 0 : i32
    %2 = arith.cmpi ne, %1, %c0_i32_0 : i32
    scf.if %2 {
      %cst_25 = arith.constant 0xFF800000 : f32
      %40 = vector.broadcast %cst_25 : f32 to vector<8x1xf32>
      %c0_26 = arith.constant 0 : index
      %c0_27 = arith.constant 0 : index
      %41 = vector.load %arg7[%c0_26, %c0_27] : memref<8x1xf32, #tpu.memory_space<vmem>>, vector<8x1xf32>
      tpu.vector_store %arg7[%c0_26, %c0_27], %40 {strides = array<i32>} : memref<8x1xf32, #tpu.memory_space<vmem>>, vector<8x1xf32>,
      %c0_i32_28 = arith.constant 0 : i32
      %42 = vector.broadcast %c0_i32_28 : i32 to vector<8x1xi32>
      %c0_29 = arith.constant 0 : index
      %c0_30 = arith.constant 0 : index
      %43 = vector.load %arg8[%c0_29, %c0_30] : memref<8x1xi32, #tpu.memory_space<vmem>>, vector<8x1xi32>
      tpu.vector_store %arg8[%c0_29, %c0_30], %42 {strides = array<i32>} : memref<8x1xi32, #tpu.memory_space<vmem>>, vector<8x1xi32>,
    } else {
    }
    %c0 = arith.constant 0 : index
    %c0_1 = arith.constant 0 : index
    %c0_2 = arith.constant 0 : index
    %3 = vector.load %arg2[%c0, %c0_1, %c0_2] : memref<1x4x128xf32, #tpu.memory_space<vmem>>, vector<1x4x128xf32>
    %4 = vector.shape_cast %3 : vector<1x4x128xf32> to vector<4x128xf32>
    %c0_3 = arith.constant 0 : index
    %c0_4 = arith.constant 0 : index
    %5 = vector.load %arg3[%c0_3, %c0_4] : memref<8x4xf32, #tpu.memory_space<vmem>>, vector<8x4xf32>
    %c0_5 = arith.constant 0 : index
    %c0_6 = arith.constant 0 : index
    %6 = vector.load %arg4[%c0_5, %c0_6] : memref<8x1xf32, #tpu.memory_space<vmem>>, vector<8x1xf32>
    %cst = arith.constant dense<0.000000e+00> : vector<8x128xf32>
    %7 = tpu.matmul %5, %4, %cst {dimension_numbers = #tpu.dot_dimension_numbers<[1], [0], [0], [1], [0, 0, 1, 1], [], []>} : vector<8x4xf32>, vector<4x128xf32>, vector<8x128xf32> -> vector<8x128xf32>
    %8 = vector.broadcast %6 : vector<8x1xf32> to vector<8x128xf32>
    %9 = arith.addf %7, %8 : vector<8x128xf32>
    %c0_7 = arith.constant 0 : index
    %c0_8 = arith.constant 0 : index
    %c0_9 = arith.constant 0 : index
    %10 = vector.load %arg5[%c0_7, %c0_8, %c0_9] : memref<1x8x128xf32, #tpu.memory_space<vmem>>, vector<1x8x128xf32>
    %11 = vector.shape_cast %10 : vector<1x8x128xf32> to vector<8x128xf32>
    %12 = vector.shape_cast %9 : vector<8x128xf32> to vector<1x8x128xf32>
    tpu.vector_store %arg5[%c0_7, %c0_8, %c0_9], %12 {strides = array<i32>} : memref<1x8x128xf32, #tpu.memory_space<vmem>>, vector<1x8x128xf32>,
    %c128_i32 = arith.constant 128 : i32
    %13 = arith.muli %arg1, %c128_i32 : i32
    %14 = tpu.iota {dimensions = array<i32: 1>} : vector<8x128xi32>
    %15 = vector.broadcast %13 : i32 to vector<8x128xi32>
    %16 = arith.addi %14, %15 : vector<8x128xi32>
    %c256_i32 = arith.constant 256 : i32
    %17 = vector.broadcast %c256_i32 : i32 to vector<8x128xi32>
    %18 = arith.cmpi slt, %16, %17 : vector<8x128xi32>
    %cst_10 = arith.constant 0xFF800000 : f32
    %19 = vector.broadcast %cst_10 : f32 to vector<8x128xf32>
    %20 = arith.select %18, %9, %19 : vector<8x128xi1>, vector<8x128xf32>
    %cst_11 = arith.constant dense<0xFF800000> : vector<8xf32>
    %21 = vector.multi_reduction <maximumf>, %20, %cst_11 [1] : vector<8x128xf32> to vector<8xf32>
    %22 = vector.shape_cast %21 : vector<8xf32> to vector<8x1xf32>
    %23 = vector.broadcast %22 : vector<8x1xf32> to vector<8x128xf32>
    %24 = arith.cmpf oeq, %20, %23 : vector<8x128xf32>
    %c256_i32_12 = arith.constant 256 : i32
    %25 = vector.broadcast %c256_i32_12 : i32 to vector<8x128xi32>
    %26 = arith.select %24, %16, %25 : vector<8x128xi1>, vector<8x128xi32>
    %cst_13 = arith.constant dense<2147483647> : vector<8xi32>
    %27 = vector.multi_reduction <minsi>, %26, %cst_13 [1] : vector<8x128xi32> to vector<8xi32>
    %28 = vector.shape_cast %27 : vector<8xi32> to vector<8x1xi32>
    %c0_14 = arith.constant 0 : index
    %c0_15 = arith.constant 0 : index
    %29 = vector.load %arg7[%c0_14, %c0_15] : memref<8x1xf32, #tpu.memory_space<vmem>>, vector<8x1xf32>
    %30 = arith.cmpf ogt, %22, %29 : vector<8x1xf32>
    %c0_16 = arith.constant 0 : index
    %c0_17 = arith.constant 0 : index
    %31 = vector.load %arg8[%c0_16, %c0_17] : memref<8x1xi32, #tpu.memory_space<vmem>>, vector<8x1xi32>
    %32 = arith.select %30, %28, %31 : vector<8x1xi1>, vector<8x1xi32>
    %c0_18 = arith.constant 0 : index
    %c0_19 = arith.constant 0 : index
    %33 = vector.load %arg8[%c0_18, %c0_19] : memref<8x1xi32, #tpu.memory_space<vmem>>, vector<8x1xi32>
    tpu.vector_store %arg8[%c0_18, %c0_19], %32 {strides = array<i32>} : memref<8x1xi32, #tpu.memory_space<vmem>>, vector<8x1xi32>,
    %c0_20 = arith.constant 0 : index
    %c0_21 = arith.constant 0 : index
    %34 = vector.load %arg7[%c0_20, %c0_21] : memref<8x1xf32, #tpu.memory_space<vmem>>, vector<8x1xf32>
    %35 = arith.select %30, %22, %34 : vector<8x1xi1>, vector<8x1xf32>
    %c0_22 = arith.constant 0 : index
    %c0_23 = arith.constant 0 : index
    %36 = vector.load %arg7[%c0_22, %c0_23] : memref<8x1xf32, #tpu.memory_space<vmem>>, vector<8x1xf32>
    tpu.vector_store %arg7[%c0_22, %c0_23], %35 {strides = array<i32>} : memref<8x1xf32, #tpu.memory_space<vmem>>, vector<8x1xf32>,
    %c1_i32 = arith.constant 1 : i32
    %37 = arith.cmpi eq, %arg1, %c1_i32 : i32
    %38 = arith.extui %37 : i1 to i32
    %c0_i32_24 = arith.constant 0 : i32
    %39 = arith.cmpi ne, %38, %c0_i32_24 : i32
    scf.if %39 {
      %c0_25 = arith.constant 0 : index
      %c0_26 = arith.constant 0 : index
      %40 = vector.load %arg8[%c0_25, %c0_26] : memref<8x1xi32, #tpu.memory_space<vmem>>, vector<8x1xi32>
      %c0_27 = arith.constant 0 : index
      %c0_28 = arith.constant 0 : index
      %c0_29 = arith.constant 0 : index
      %41 = vector.load %arg6[%c0_27, %c0_28, %c0_29] : memref<1x8x1xi32, #tpu.memory_space<vmem>>, vector<1x8x1xi32>
      %42 = vector.shape_cast %41 : vector<1x8x1xi32> to vector<8x1xi32>
      %43 = vector.shape_cast %40 : vector<8x1xi32> to vector<1x8x1xi32>
      tpu.vector_store %arg6[%c0_27, %c0_28, %c0_29], %43 {strides = array<i32>} : memref<1x8x1xi32, #tpu.memory_space<vmem>>, vector<1x8x1xi32>,
    } else {
    }
    return
  }
  func.func @transform_0(%arg0: i32, %arg1: i32) -> (i32, i32, i32) {
    %c0_i32 = arith.constant 0 : i32
    %c0_i32_0 = arith.constant 0 : i32
    return %arg0, %c0_i32, %arg1 : i32, i32, i32
  }
  func.func @transform_1(%arg0: i32, %arg1: i32) -> (i32, i32) {
    %c0_i32 = arith.constant 0 : i32
    %c0_i32_0 = arith.constant 0 : i32
    %c0_i32_1 = arith.constant 0 : i32
    return %c0_i32, %c0_i32_0 : i32, i32
  }
  func.func @transform_2(%arg0: i32, %arg1: i32) -> (i32, i32) {
    %c0_i32 = arith.constant 0 : i32
    %c0_i32_0 = arith.constant 0 : i32
    %c0_i32_1 = arith.constant 0 : i32
    return %c0_i32, %c0_i32_0 : i32, i32
  }
  func.func @transform_3(%arg0: i32, %arg1: i32) -> (i32, i32, i32) {
    %c0_i32 = arith.constant 0 : i32
    %c0_i32_0 = arith.constant 0 : i32
    return %arg0, %c0_i32, %arg1 : i32, i32, i32
  }
  func.func @transform_4(%arg0: i32, %arg1: i32) -> (i32, i32, i32) {
    %c0_i32 = arith.constant 0 : i32
    %c0_i32_0 = arith.constant 0 : i32
    %c0_i32_1 = arith.constant 0 : i32
    return %arg0, %c0_i32, %c0_i32_0 : i32, i32, i32
  }
}

</mosaic_0001>

<llo_original>
// kernel: tpu_custom_call.1
$region0: #{tpu_custom_call.1}
  #allocation0 [shape = 'u32[]', space=smem, size = 0x4, offset = 0x4, fixed_abs, tag = 'smem constant byte address 0x4 - core index']
  #allocation1 [shape = 'u32[144,128]{1,0:T(1,128)}', space=vmem, size = 0x12000, scoped, tag = 'internal scratch']
  #allocation2 [shape = 'f32[8,1]{1,0:T(8,128)}', space=vmem, size = 0x1000, scoped, tag = 'scratch operand']
  #allocation3 [shape = 's32[8,1]{1,0:T(8,128)}', space=vmem, size = 0x1000, scoped, tag = 'scratch operand']
  %s0 = inlined_call_operand.hbm [shape: f32[2,4,256], index: 0, kind: input, shape index: {}]
  %s1 = inlined_call_operand.hbm [shape: f32[8,4], index: 1, kind: input, shape index: {}]
  %s2 = inlined_call_operand.hbm [shape: f32[8,1], index: 2, kind: input, shape index: {}]
  %s3 = inlined_call_operand.hbm [shape: f32[2,8,256], index: 3, kind: output, shape index: {0}]
  %s4 = inlined_call_operand.hbm [shape: s32[2,8,1], index: 4, kind: output, shape index: {1}]
  %5 = xla_tuple %s3, %s4
  %s6 = sld [smem:[#allocation0]]
  $region73: #{tpu_custom_call.1} parent=0
    _
  %s8 = ssub.s32 1, %s6
  %s9 = scalar_select 0, %s8, %s6
  $region1: #{tpu_custom_call.1} parent=0
    #allocation4 [shape = 'u8[4096]{0}', space=vmem, size = 0x1000, scoped, tag = 'input window, operand 0']
    #allocation5 [shape = 's32[2]{0}', space=sflag, size = 0x8, scoped, tag = 'scoped memory for tpu_custom_call.1']
    #allocation6 [shape = 's32[2]{0}', space=sflag, size = 0x8, scoped, tag = 'scoped memory for tpu_custom_call.1']
    #allocation7 [shape = 'u8[4096]{0}', space=vmem, size = 0x1000, scoped, tag = 'input window, operand 1, single buffered']
    #allocation8 [shape = 's32[1]{0}', space=sflag, size = 0x4, scoped, tag = 'scoped memory for tpu_custom_call.1']
    #allocation9 [shape = 'u8[4096]{0}', space=vmem, size = 0x1000, scoped, tag = 'input window, operand 2, single buffered']
    #allocation10 [shape = 'u8[8192]{0}', space=vmem, size = 0x2000, scoped, tag = 'output window, operand 0']
    #allocation11 [shape = 'u8[8192]{0}', space=vmem, size = 0x2000, scoped, tag = 'output window, operand 1']
    #allocation12 [shape = 's32[2]{0}', space=sflag, size = 0x8, scoped, tag = 'scoped memory for tpu_custom_call.1']
    %10 = vsyncpa [#allocation5], 0
    %s11 = scalar_lea.sflag [#allocation5], 1
    %12 = vsyncpa %s11, 0
    %13 = vsyncpa [#allocation8], 0
    %14 = vsyncpa [#allocation6], 0
    %s15 = scalar_lea.sflag [#allocation6], 1
    %16 = vsyncpa %s15, 0
    %17 = vsyncpa [#allocation12], 0
    %s18 = scalar_lea.sflag [#allocation12], 1
    %19 = vsyncpa %s18, 0
    loop: start=0, step=1, limit=6
    $region2: #{tpu_custom_call.1} parent=1 // loop_pre_header
      _
    $region3: #{tpu_custom_call.1} parent=1 // loop_header
      %s21 = sphi 0, %s25
      %p22 = scmp.ge.s32.totalorder %s21, 6
      %s28 = sphi 0, %s40
      %s29 = sphi 0, %s36
      %s30 = sphi 0, %s28
      %s31 = sphi 0, %s29
      %s32 = sphi 0, %s30
      %s33 = sphi 0, %s31
      %s45 = sphi 0, %s47
      %s48 = sphi 0, %s45
      %s49 = sphi 0, %s48
      %s65 = sphi 0, %s49
      %s69 = sphi 0, %s69
      %s71 = sphi 0, %s69
      %s72 = sphi 0, %s71
      %s86 = sphi 0, %s72
      %s90 = sphi 0, %s90
      %s92 = sphi 0, %s90
      %s93 = sphi 0, %s92
      %s107 = sphi 0, %s93
      %s115 = sphi 0, %s117
      %s118 = sphi 0, %s115
      %s119 = sphi 0, %s118
      %s135 = sphi 0, %s119
      %s141 = sphi 0, %s143
      %s144 = sphi 0, %s141
      %s145 = sphi 0, %s144
      %s161 = sphi 0, %s145
    $region4: #{tpu_custom_call.1} parent=1 // loop_header_branch
      %24 = sbr.rel (%p22) target = $region8
    $region5: #{tpu_custom_call.1} parent=1 // loop_body
      %s26 = ssub.s32 %s21, 1
      %s27 = ssub.s32 %s21, 2
      %s34 = sadd.s32 1, %s29
      %p35 = scmp.ge.s32.totalorder %s34, 2
      %s36 = scalar_select %p35, 0, %s34
      %s37 = sadd.s32 1, %s28
      %s38 = scalar_select %p35, %s37, %s28
      %p39 = scmp.ge.s32.totalorder %s38, 2
      %s40 = scalar_select %p39, 0, %s38
      %s41 = ssub.s32 %s28, %s40
      %s42 = ssub.s32 %s29, %s36
      %s43 = sor.u32 %s41, %s42
      %p44 = scmp.eq.s32.totalorder %s43, 0
      %s46 = sadd.s32 %s45, 1
      %s47 = scalar_select %p44, %s45, %s46
      %p50 = pneg %p44
      %p51 = scmp.eq.s32.totalorder %s21, 3
      %p52 = por %p50, %p51
      %p53 = scmp.ne.s32.totalorder %s45, %s48
      %p54 = scmp.eq.s32.totalorder %s21, 0
      %p55 = por %p53, %p54
      %p56 = scmp.ne.s32.totalorder %s45, %s48
      %p57 = scmp.eq.s32.totalorder %s26, 3
      %p58 = por %p56, %p57
      %p59 = scmp.ne.s32.totalorder %s48, %s49
      %p60 = scmp.eq.s32.totalorder %s26, 0
      %p61 = por %p59, %p60
      %p62 = scmp.ne.s32.totalorder %s48, %s49
      %p63 = scmp.eq.s32.totalorder %s27, 3
      %p64 = por %p62, %p63
      %p66 = scmp.ne.s32.totalorder %s49, %s65
      %p67 = scmp.eq.s32.totalorder %s27, 0
      %p68 = por %p66, %p67
      %s70 = sadd.s32 %s69, 1
      %p73 = scmp.eq.s32.totalorder %s21, 3
      %p74 = scmp.ne.s32.totalorder %s69, %s71
      %p75 = scmp.eq.s32.totalorder %s21, 0
      %p76 = por %p74, %p75
      %p77 = scmp.ne.s32.totalorder %s69, %s71
      %p78 = scmp.eq.s32.totalorder %s26, 3
      %p79 = por %p77, %p78
      %p80 = scmp.ne.s32.totalorder %s71, %s72
      %p81 = scmp.eq.s32.totalorder %s26, 0
      %p82 = por %p80, %p81
      %p83 = scmp.ne.s32.totalorder %s71, %s72
      %p84 = scmp.eq.s32.totalorder %s27, 3
      %p85 = por %p83, %p84
      %p87 = scmp.ne.s32.totalorder %s72, %s86
      %p88 = scmp.eq.s32.totalorder %s27, 0
      %p89 = por %p87, %p88
      %s91 = sadd.s32 %s90, 1
      %p94 = scmp.eq.s32.totalorder %s21, 3
      %p95 = scmp.ne.s32.totalorder %s90, %s92
      %p96 = scmp.eq.s32.totalorder %s21, 0
      %p97 = por %p95, %p96
      %p98 = scmp.ne.s32.totalorder %s90, %s92
      %p99 = scmp.eq.s32.totalorder %s26, 3
      %p100 = por %p98, %p99
      %p101 = scmp.ne.s32.totalorder %s92, %s93
      %p102 = scmp.eq.s32.totalorder %s26, 0
      %p103 = por %p101, %p102
      %p104 = scmp.ne.s32.totalorder %s92, %s93
      %p105 = scmp.eq.s32.totalorder %s27, 3
      %p106 = por %p104, %p105
      %p108 = scmp.ne.s32.totalorder %s93, %s107
      %p109 = scmp.eq.s32.totalorder %s27, 0
      %p110 = por %p108, %p109
      %s111 = ssub.s32 %s28, %s40
      %s112 = ssub.s32 %s29, %s36
      %s113 = sor.u32 %s111, %s112
      %p114 = scmp.eq.s32.totalorder %s113, 0
      %s116 = sadd.s32 %s115, 1
      %s117 = scalar_select %p114, %s115, %s116
      %p120 = pneg %p114
      %p121 = scmp.eq.s32.totalorder %s21, 3
      %p122 = por %p120, %p121
      %p123 = scmp.ne.s32.totalorder %s115, %s118
      %p124 = scmp.eq.s32.totalorder %s21, 0
      %p125 = por %p123, %p124
      %p126 = scmp.ne.s32.totalorder %s115, %s118
      %p127 = scmp.eq.s32.totalorder %s26, 3
      %p128 = por %p126, %p127
      %p129 = scmp.ne.s32.totalorder %s118, %s119
      %p130 = scmp.eq.s32.totalorder %s26, 0
      %p131 = por %p129, %p130
      %p132 = scmp.ne.s32.totalorder %s118, %s119
      %p133 = scmp.eq.s32.totalorder %s27, 3
      %p134 = por %p132, %p133
      %p136 = scmp.ne.s32.totalorder %s119, %s135
      %p137 = scmp.eq.s32.totalorder %s27, 0
      %p138 = por %p136, %p137
      %s139 = ssub.s32 %s28, %s40
      %p140 = scmp.eq.s32.totalorder %s139, 0
      %s142 = sadd.s32 %s141, 1
      %s143 = scalar_select %p140, %s141, %s142
      %p146 = pneg %p140
      %p147 = scmp.eq.s32.totalorder %s21, 3
      %p148 = por %p146, %p147
      %p149 = scmp.ne.s32.totalorder %s141, %s144
      %p150 = scmp.eq.s32.totalorder %s21, 0
      %p151 = por %p149, %p150
      %p152 = scmp.ne.s32.totalorder %s141, %s144
      %p153 = scmp.eq.s32.totalorder %s26, 3
      %p154 = por %p152, %p153
      %p155 = scmp.ne.s32.totalorder %s144, %s145
      %p156 = scmp.eq.s32.totalorder %s26, 0
      %p157 = por %p155, %p156
      %p158 = scmp.ne.s32.totalorder %s144, %s145
      %p159 = scmp.eq.s32.totalorder %s27, 3
      %p160 = por %p158, %p159
      %p162 = scmp.ne.s32.totalorder %s145, %s161
      %p163 = scmp.eq.s32.totalorder %s27, 0
      %p164 = por %p162, %p163
      %p165 = scmp.le.s32.totalorder 1, %s21
      %p166 = scmp.lt.s32.totalorder %s21, 5
      %p167 = pnand %p165, %p166
      %p168 = pneg %p167
      // Predicated region
      $region9: #{tpu_custom_call.1} parent=5 // pred_check
        _
      $region10: #{tpu_custom_call.1} parent=5 // pred_check_branch
        %170 = sbr.rel (%p167) target = $region12
      $region11: #{tpu_custom_call.1} parent=5 // pred_region
        %s171 = ssub.s32 %s21, 1
        // Predicated region
        $region13: #{tpu_custom_call.1} parent=11 // pred_check
          %p172 = pneg %p82
        $region14: #{tpu_custom_call.1} parent=11 // pred_check_branch
          %174 = sbr.rel (%p172) target = $region16
        $region15: #{tpu_custom_call.1} parent=11 // pred_region
          %s176 = ssub.s32 128, 128
          %177 = vsyncadd [#allocation8], %s176
          %s179 = sshll.u32 [#allocation7], 4
          %s180 = int_to_ptr.vmem [resolvable:$true] %s179
          %182 = dma.hbm_to_vmem [thread:$0]  %s1, 128, %s180, [#allocation8]
        $region16: #{tpu_custom_call.1} parent=11 // pred_fallthru
          _
        // Predicated region
        $region17: #{tpu_custom_call.1} parent=11 // pred_check
          %p183 = pneg %p103
        $region18: #{tpu_custom_call.1} parent=11 // pred_check_branch
          %185 = sbr.rel (%p183) target = $region20
        $region19: #{tpu_custom_call.1} parent=11 // pred_region
          %s187 = ssub.s32 128, 128
          %188 = vsyncadd [#allocation8], %s187
          %s190 = sshll.u32 [#allocation9], 4
          %s191 = int_to_ptr.vmem [resolvable:$true] %s190
          %193 = dma.hbm_to_vmem [thread:$0]  %s2, 128, %s191, [#allocation8]
        $region20: #{tpu_custom_call.1} parent=11 // pred_fallthru
          _
      $region12: #{tpu_custom_call.1} parent=5 // pred_fallthru
        _
      %p194 = scmp.lt.s32.totalorder %s21, 4
      // Predicated region
      $region21: #{tpu_custom_call.1} parent=5 // pred_check
        %p195 = pneg %p194
      $region22: #{tpu_custom_call.1} parent=5 // pred_check_branch
        %197 = sbr.rel (%p195) target = $region24
      $region23: #{tpu_custom_call.1} parent=5 // pred_region
        // Predicated region
        $region25: #{tpu_custom_call.1} parent=23 // pred_check
          %p198 = pneg %p55
        $region26: #{tpu_custom_call.1} parent=23 // pred_check_branch
          %200 = sbr.rel (%p198) target = $region28
        $region27: #{tpu_custom_call.1} parent=23 // pred_region
          %s201 = sand.u32 %s45, 1
          %s202 = scalar_lea.sflag [#allocation5], %s201
          %s203 = sand.u32 %s45, 1
          %s204 = smul.addr %s203, 4
          %s205 = scalar_lea.vmem [#allocation4], %s204
          %s207 = ssub.s32 64, 64
          %208 = vsyncadd %s202, %s207
          %s209 = smul.addr %s28, 2
          %s210 = sadd.s32 %s29, %s209
          %s211 = smul.addr %s210, 64
          %s212 = scalar_lea.hbm %s0, %s211
          %s214 = sshll.u32 %s205, 4
          %s215 = int_to_ptr.vmem [resolvable:$true] %s214
          %217 = dma.hbm_to_vmem [thread:$0]  %s212, 64, %s215, %s202
        $region28: #{tpu_custom_call.1} parent=23 // pred_fallthru
          _
      $region24: #{tpu_custom_call.1} parent=5 // pred_fallthru
        _
      %p218 = scmp.le.s32.totalorder 1, %s21
      %p219 = scmp.lt.s32.totalorder %s21, 5
      %p220 = pnand %p218, %p219
      %p221 = pneg %p220
      // Predicated region
      $region29: #{tpu_custom_call.1} parent=5 // pred_check
        _
      $region30: #{tpu_custom_call.1} parent=5 // pred_check_branch
        %223 = sbr.rel (%p220) target = $region32
      $region31: #{tpu_custom_call.1} parent=5 // pred_region
        %s224 = ssub.s32 %s21, 1
        %s225 = sand.u32 %s48, 1
        %s226 = scalar_lea.sflag [#allocation5], %s225
        %s227 = sand.u32 %s48, 1
        %s228 = smul.addr %s227, 4
        %s229 = scalar_lea.vmem [#allocation4], %s228
        // Predicated region
        $region33: #{tpu_custom_call.1} parent=31 // pred_check
          %p230 = pneg %p61
        $region34: #{tpu_custom_call.1} parent=31 // pred_check_branch
          %232 = sbr.rel (%p230) target = $region36
        $region35: #{tpu_custom_call.1} parent=31 // pred_region
          %233 = dma.done %s226, 64
        $region36: #{tpu_custom_call.1} parent=31 // pred_fallthru
          _
        // Predicated region
        $region37: #{tpu_custom_call.1} parent=31 // pred_check
          %p234 = pneg %p82
        $region38: #{tpu_custom_call.1} parent=31 // pred_check_branch
          %236 = sbr.rel (%p234) target = $region40
        $region39: #{tpu_custom_call.1} parent=31 // pred_region
          %237 = dma.done [#allocation8], 128
        $region40: #{tpu_custom_call.1} parent=31 // pred_fallthru
          _
        // Predicated region
        $region41: #{tpu_custom_call.1} parent=31 // pred_check
          %p238 = pneg %p103
        $region42: #{tpu_custom_call.1} parent=31 // pred_check_branch
          %240 = sbr.rel (%p238) target = $region44
        $region43: #{tpu_custom_call.1} parent=31 // pred_region
          %241 = dma.done [#allocation8], 128
        $region44: #{tpu_custom_call.1} parent=31 // pred_fallthru
          _
        %s242 = sand.u32 %s48, 1
        %s243 = scalar_lea.sflag [#allocation5], %s242
        %s244 = sand.u32 %s48, 1
        %s245 = smul.addr %s244, 4
        %s246 = scalar_lea.vmem [#allocation4], %s245
        %p247 = pneg %p61
        %p248 = pneg %p58
        %p249 = pneg %p82
        %p250 = pneg %p79
        %p251 = pneg %p103
        %p252 = pneg %p100
        %p253 = pneg %p131
        %p254 = pneg %p128
        %s255 = sand.u32 %s118, 1
        %s256 = scalar_lea.sflag [#allocation6], %s255
        %s257 = sand.u32 %s118, 1
        %s258 = smul.addr %s257, 8
        %s259 = scalar_lea.vmem [#allocation10], %s258
        %p260 = pneg %p157
        %p261 = pneg %p154
        %s262 = sand.u32 %s144, 1
        %s263 = scalar_lea.sflag [#allocation12], %s262
        %s264 = sand.u32 %s144, 1
        %s265 = smul.addr %s264, 8
        %s266 = scalar_lea.vmem [#allocation11], %s265
        %p267 = scmp.eq.s32.totalorder %s31, 0
        // Predicated region
        $region45: #{tpu_custom_call.1} parent=31 // pred_check
          %p268 = pneg %p267
        $region46: #{tpu_custom_call.1} parent=31 // pred_check_branch
          %270 = sbr.rel (%p268) target = $region48
        $region47: #{tpu_custom_call.1} parent=31 // pred_region
          %vm271 = vcmask 7168
          %272 = vst.msk [vmem:[#allocation2] sm:$0xff] %vm271, -inf
          %273 = vst.msk [vmem:[#allocation3] sm:$0xff] %vm271, 0
        $region48: #{tpu_custom_call.1} parent=31 // pred_fallthru
          _
        %v274 = vld [vmem:[%s229] sm:$0xf]
        %v275 = vld [vmem:[#allocation7] sm:$0xff]
        %v276 = vld [vmem:[#allocation9] sm:$0xff]
        %278 = vset.pattern.permute.xlu0 0
        %279 = vperm.xlu0 %278, %v276
        %v280 = vpop.permute.xlu0 %279
        %vm282 = vcmask 31744
        %v284 = vsel %vm282, %v275, 0
        %vm286 = vcmask 1043456
        %v288 = vsel %vm286, %v274, 0
        %290 = vmatprep.subr.mxu0 0.0
        %291 = vmatpush1.msra.mxu0 %v288
        %292 = vmatprep.subr.mxu0 0.0
        %293 = vmatpush1.msra.mxu0 0.0
        %294 = vmatprep.subr.mxu0 0.0
        %295 = vmatpush1.msra.mxu0 0.0
        %296 = vmatprep.subr.mxu0 0.0
        %297 = vmatpush1.msra.mxu0 0.0
        %298 = vmatprep.subr.mxu0 0.0
        %299 = vmatpush1.msra.mxu0 0.0
        %300 = vmatprep.subr.mxu0 0.0
        %301 = vmatpush1.msra.mxu0 0.0
        %302 = vmatprep.subr.mxu0 0.0
        %303 = vmatpush1.msra.mxu0 0.0
        %304 = vmatprep.subr.mxu0 0.0
        %305 = vmatpush1.msra.mxu0 0.0
        %306 = vmatprep.subr.mxu0 0.0
        %307 = vmatpush1.msra.mxu0 0.0
        %308 = vmatprep.subr.mxu0 0.0
        %309 = vmatpush1.msra.mxu0 0.0
        %310 = vmatprep.subr.mxu0 0.0
        %311 = vmatpush1.msra.mxu0 0.0
        %312 = vmatprep.subr.mxu0 0.0
        %313 = vmatpush1.msra.mxu0 0.0
        %314 = vmatprep.subr.mxu0 0.0
        %315 = vmatpush1.msra.mxu0 0.0
        %316 = vmatprep.subr.mxu0 0.0
        %317 = vmatpush1.msra.mxu0 0.0
        %318 = vmatprep.subr.mxu0 0.0
        %319 = vmatpush1.msra.mxu0 0.0
        %320 = vmatprep.subr.mxu0 0.0
        %321 = vmatpush1.msra.mxu0 0.0
        %322 = vmatprep.subr.mxu0 0.0
        %323 = vmatpush1.msra.mxu0 0.0
        %324 = vmatprep.subr.mxu0 0.0
        %325 = vmatpush1.msra.mxu0 0.0
        %326 = vmatprep.subr.mxu0 0.0
        %327 = vmatpush1.msra.mxu0 0.0
        %328 = vmatprep.subr.mxu0 0.0
        %329 = vmatpush1.msra.mxu0 0.0
        %330 = vmatprep.subr.mxu0 0.0
        %331 = vmatpush1.msra.mxu0 0.0
        %332 = vmatprep.subr.mxu0 0.0
        %333 = vmatpush1.msra.mxu0 0.0
        %334 = vmatprep.subr.mxu0 0.0
        %335 = vmatpush1.msra.mxu0 0.0
        %336 = vmatprep.subr.mxu0 0.0
        %337 = vmatpush1.msra.mxu0 0.0
        %338 = vmatprep.subr.mxu0 0.0
        %339 = vmatpush1.msra.mxu0 0.0
        %340 = vmatprep.subr.mxu0 0.0
        %341 = vmatpush1.msra.mxu0 0.0
        %342 = vmatprep.subr.mxu0 0.0
        %343 = vmatpush1.msra.mxu0 0.0
        %344 = vmatprep.subr.mxu0 0.0
        %345 = vmatpush1.msra.mxu0 0.0
        %346 = vmatprep.subr.mxu0 0.0
        %347 = vmatpush1.msra.mxu0 0.0
        %348 = vmatprep.subr.mxu0 0.0
        %349 = vmatpush1.msra.mxu0 0.0
        %350 = vmatprep.subr.mxu0 0.0
        %351 = vmatpush1.msra.mxu0 0.0
        %352 = vmatprep.subr.mxu0 0.0
        %353 = vmatpush1.msra.mxu0 0.0
        %354 = vmatprep.mubr.f32.mxu0 0.0
        %355 = vmatmul.mubr.f32.gmra.mrb[0].mxu0 %v284
        %v356 = vpop.f32.mrb[0].mxu0
        %v357 = vadd.f32 %v280, %v356
        %v358 = vpop.f32.mrb[0].mxu0
        %359 = vdwg.mxu0
        %360 = vst [vmem:[%s259] sm:$0xff] %v357
        %s361 = smul.u32 %s31, 128
        %v362 = vlaneseq
        %v363 = vand.u32 %v362, 127
        %v364 = vstv %s361
        %v365 = vadd.s32 %v363, %v364
        %vm366 = vcmp.lt.s32.totalorder %v365, 256
        %v367 = vsel %vm366, %v357, -inf
        %368 = vmax.xlane.f32.xlu0 %v367
        %v369 = vpop.xlane.xlu0 %368
        %vm370 = vcmp.eq.f32.partialorder %v367, %v369
        %v371 = vsel %vm370, %v365, 256
        %v372 = vand.u32 %v371, 65535
        %v373 = vshra.s32 %v371, 16
        %v374 = vcvt.s32.f32 %v372
        %v375 = vcvt.s32.f32 %v373
        %376 = vmin.xlane.f32.xlu0 %v375
        %v377 = vpop.xlane.xlu0 %376
        %vm378 = vcmp.eq.f32.partialorder %v375, %v377
        %v379 = vsel %vm378, %v374, inf
        %380 = vmin.xlane.f32.xlu0 %v379
        %v381 = vpop.xlane.xlu0 %380
        %v382 = vcvt.f32.s32 %v381
        %v383 = vcvt.f32.s32 %v377
        %v384 = vshll.u32 %v383, 16
        %v385 = vadd.s32 %v384, %v382
        %v386 = vld [vmem:[#allocation2] sm:$0xff]
        %vm387 = vcmp.gt.f32.partialorder %v369, %v386
        %v388 = vld [vmem:[#allocation3] sm:$0xff]
        %v389 = vsel %vm387, %v385, %v388
        %vm390 = vcmask 7168
        %391 = vst.msk [vmem:[#allocation3] sm:$0xff] %vm390, %v389
        %v392 = vld [vmem:[#allocation2] sm:$0xff]
        %v393 = vsel %vm387, %v369, %v392
        %394 = vst.msk [vmem:[#allocation2] sm:$0xff] %vm390, %v393
        %p395 = scmp.eq.s32.totalorder %s31, 1
        // Predicated region
        $region49: #{tpu_custom_call.1} parent=31 // pred_check
          %p396 = pneg %p395
        $region50: #{tpu_custom_call.1} parent=31 // pred_check_branch
          %398 = sbr.rel (%p396) target = $region52
        $region51: #{tpu_custom_call.1} parent=31 // pred_region
          %v399 = vld [vmem:[#allocation3] sm:$0xff]
          %400 = vst.msk [vmem:[%s266] sm:$0xff] %vm390, %v399
        $region52: #{tpu_custom_call.1} parent=31 // pred_fallthru
          _
        %s401 = sand.u32 %s118, 1
        %s402 = scalar_lea.sflag [#allocation6], %s401
        %s403 = sand.u32 %s118, 1
        %s404 = smul.addr %s403, 8
        %s405 = scalar_lea.vmem [#allocation10], %s404
        %s406 = sand.u32 %s144, 1
        %s407 = scalar_lea.sflag [#allocation12], %s406
        %s408 = sand.u32 %s144, 1
        %s409 = smul.addr %s408, 8
        %s410 = scalar_lea.vmem [#allocation11], %s409
        // Predicated region
        $region53: #{tpu_custom_call.1} parent=31 // pred_check
          %p411 = pneg %p128
        $region54: #{tpu_custom_call.1} parent=31 // pred_check_branch
          %413 = sbr.rel (%p411) target = $region56
        $region55: #{tpu_custom_call.1} parent=31 // pred_region
          %s415 = ssub.s32 128, 128
          %416 = vsyncadd %s402, %s415
          %s417 = smul.addr %s30, 2
          %s418 = sadd.s32 %s31, %s417
          %s419 = smul.addr %s418, 128
          %s420 = scalar_lea.hbm %s3, %s419
          %s422 = sshll.u32 %s405, 4
          %s423 = int_to_ptr.vmem [resolvable:$true] %s422
          %425 = dma.vmem_to_hbm [thread:$0]  %s423, 128, %s420, %s402
        $region56: #{tpu_custom_call.1} parent=31 // pred_fallthru
          _
        // Predicated region
        $region57: #{tpu_custom_call.1} parent=31 // pred_check
          %p426 = pneg %p154
        $region58: #{tpu_custom_call.1} parent=31 // pred_check_branch
          %428 = sbr.rel (%p426) target = $region60
        $region59: #{tpu_custom_call.1} parent=31 // pred_region
          %s430 = ssub.s32 128, 128
          %431 = vsyncadd %s407, %s430
          %s432 = smul.addr %s30, 128
          %s433 = scalar_lea.hbm %s4, %s432
          %s435 = sshll.u32 %s410, 4
          %s436 = int_to_ptr.vmem [resolvable:$true] %s435
          %438 = dma.vmem_to_hbm [thread:$0]  %s436, 128, %s433, %s407
        $region60: #{tpu_custom_call.1} parent=31 // pred_fallthru
          _
      $region32: #{tpu_custom_call.1} parent=5 // pred_fallthru
        _
      %p439 = scmp.le.s32.totalorder 2, %s21
      // Predicated region
      $region61: #{tpu_custom_call.1} parent=5 // pred_check
        %p440 = pneg %p439
      $region62: #{tpu_custom_call.1} parent=5 // pred_check_branch
        %442 = sbr.rel (%p440) target = $region64
      $region63: #{tpu_custom_call.1} parent=5 // pred_region
        %s443 = ssub.s32 %s21, 2
        // Predicated region
        $region65: #{tpu_custom_call.1} parent=63 // pred_check
          %p444 = pneg %p134
        $region66: #{tpu_custom_call.1} parent=63 // pred_check_branch
          %446 = sbr.rel (%p444) target = $region68
        $region67: #{tpu_custom_call.1} parent=63 // pred_region
          %s447 = sand.u32 %s119, 1
          %s448 = scalar_lea.sflag [#allocation6], %s447
          %s449 = sand.u32 %s119, 1
          %s450 = smul.addr %s449, 8
          %s451 = scalar_lea.vmem [#allocation10], %s450
          %452 = dma.done %s448, 128
        $region68: #{tpu_custom_call.1} parent=63 // pred_fallthru
          _
        // Predicated region
        $region69: #{tpu_custom_call.1} parent=63 // pred_check
          %p453 = pneg %p160
        $region70: #{tpu_custom_call.1} parent=63 // pred_check_branch
          %455 = sbr.rel (%p453) target = $region72
        $region71: #{tpu_custom_call.1} parent=63 // pred_region
          %s456 = sand.u32 %s145, 1
          %s457 = scalar_lea.sflag [#allocation12], %s456
          %s458 = sand.u32 %s145, 1
          %s459 = smul.addr %s458, 8
          %s460 = scalar_lea.vmem [#allocation11], %s459
          %461 = dma.done %s457, 128
        $region72: #{tpu_custom_call.1} parent=63 // pred_fallthru
          _
      $region64: #{tpu_custom_call.1} parent=5 // pred_fallthru
        _
    $region6: #{tpu_custom_call.1} parent=1 // loop_footer
      %s25 = sadd.s32 1, %s21
    $region7: #{tpu_custom_call.1} parent=1 // loop_footer_branch
      %20 = sbr.rel target = $region3
    $region8: #{tpu_custom_call.1} parent=1 // loop_exit
      _
    %462 = vsyncpa [#allocation5], 1
    %s463 = scalar_lea.sflag [#allocation5], 1
    %464 = vsyncpa %s463, 1
    %465 = vsyncpa [#allocation8], 1
    %466 = vsyncpa [#allocation6], 1
    %s467 = scalar_lea.sflag [#allocation6], 1
    %468 = vsyncpa %s467, 1
    %469 = vsyncpa [#allocation12], 1
    %s470 = scalar_lea.sflag [#allocation12], 1
    %471 = vsyncpa %s470, 1

</llo_original>
